<compile_context>
chip_gen: v5e
topology: v5e:2x2
jax: 0.10.0
libtpu: 0.0.40
codegen_flags: <defaults>
</compile_context>

<pallas_src>
import functools

import jax
import jax.numpy as jnp
from jax.experimental import pallas as pl
from jax.experimental.pallas import tpu as pltpu

_LANE = 128      # lane width (last dim of a vreg)
_SUBLANE = 8     # sublane count (second-to-last dim of a vreg)


def _actor_kernel(x_ref, w1_ref, w2_ref, w3_ref, b1_ref, b2_ref, b3_ref, o_ref):
    """Fused 3-layer MLP on one (tb, in_size) batch tile.

    x_ref:  (tb, in_size)    natural-width state tile (pipelined)
    w1_ref: (in_size, 128)   layer-1 weight, hidden padded to 128 lanes (resident)
    w2_ref: (128, 128)       layer-2 weight, padded (resident)
    w3_ref: (128, out_size)  layer-3 weight, rows padded (resident)
    b1_ref: (1, 128)         layer-1 bias, padded (resident)
    b2_ref: (1, 128)         layer-2 bias, padded (resident)
    b3_ref: (1, out_size)    layer-3 bias, natural width (resident)
    o_ref:  (tb, out_size)   natural-width output tile
    """
    x = x_ref[...]

    # Layer 1: (tb, in) x (in, 128) + relu.  Padded hidden columns stay 0
    # (zero weight columns + zero bias), so they contribute nothing downstream.
    h = jnp.dot(x, w1_ref[...], preferred_element_type=jnp.float32)
    h = jnp.maximum(h + b1_ref[...], 0.0)

    # Layer 2: (tb, 128) x (128, 128) + relu.
    h = jnp.dot(h, w2_ref[...], preferred_element_type=jnp.float32)
    h = jnp.maximum(h + b2_ref[...], 0.0)

    # Layer 3: (tb, 128) x (128, out) + tanh; natural-width store.
    h = jnp.dot(h, w3_ref[...], preferred_element_type=jnp.float32)
    o_ref[...] = jnp.tanh(h + b3_ref[...]).astype(o_ref.dtype)


def _round_up(x, m):
    return ((x + m - 1) // m) * m


def pack_actor_params(params):
    """Pad/pack weights & biases once (call outside the step loop).

    Only the hidden dimension is padded to 128 lanes; the state contraction dim
    (in_size) and the output dim (out_size) stay at their natural widths so the
    batch-proportional HBM traffic is not inflated.
    """
    w1 = params["w1"].astype(jnp.float32)   # (in, hidden)
    w2 = params["w2"].astype(jnp.float32)   # (hidden, hidden)
    w3 = params["w3"].astype(jnp.float32)   # (hidden, out)
    b1 = params["b1"].reshape(1, -1).astype(jnp.float32)
    b2 = params["b2"].reshape(1, -1).astype(jnp.float32)
    b3 = params["b3"].reshape(1, -1).astype(jnp.float32)

    hidden = w1.shape[1]
    assert hidden <= _LANE, "packing assumes hidden_size <= 128"
    # TODO(synk): hidden_size > 128 would need a K/N tiling loop instead of a single pad.
    pad_h = _LANE - hidden

    w1p = jnp.pad(w1, ((0, 0), (0, pad_h)))             # (in, 128)
    w2p = jnp.pad(w2, ((0, pad_h), (0, pad_h)))         # (128, 128)
    w3p = jnp.pad(w3, ((0, pad_h), (0, 0)))             # (128, out)
    b1p = jnp.pad(b1, ((0, 0), (0, pad_h)))             # (1, 128)
    b2p = jnp.pad(b2, ((0, 0), (0, pad_h)))             # (1, 128)
    return (w1p, w2p, w3p, b1p, b2p, b3)


@functools.partial(jax.jit, static_argnames=("block_b",))
def actor_forward(state, packed, *, block_b=2048):
    """Run the fused 3-layer MLP Pallas kernel.

    state:  (B, input_size) float32
    packed: output of pack_actor_params(params)
    """
    w1p, w2p, w3p, b1p, b2p, b3p = packed
    B, in_size = state.shape
    out_size = w3p.shape[1]

    # Adaptive tiling: keep the tail padding < 8 rows per tile, and give the
    # grid >= 2 steps when the batch allows (v7x megacore + pipelining).
    n_tiles = max(1, -(-B // block_b))
    if n_tiles == 1 and B >= 2 * _SUBLANE:
        n_tiles = 2
    tb = _round_up(-(-B // n_tiles), _SUBLANE)
    bp = n_tiles * tb

    x = state.astype(jnp.float32)
    if bp != B:
        x = jnp.pad(x, ((0, bp - B), (0, 0)))

    out = pl.pallas_call(
        _actor_kernel,
        out_shape=jax.ShapeDtypeStruct((bp, out_size), jnp.float32),
        grid=(n_tiles,),
        in_specs=[
            pl.BlockSpec((tb, in_size), lambda i: (i, 0)),   # state tile (pipelined)
            pl.BlockSpec(w1p.shape, lambda i: (0, 0)),       # resident weights / biases
            pl.BlockSpec(w2p.shape, lambda i: (0, 0)),
            pl.BlockSpec(w3p.shape, lambda i: (0, 0)),
            pl.BlockSpec(b1p.shape, lambda i: (0, 0)),
            pl.BlockSpec(b2p.shape, lambda i: (0, 0)),
            pl.BlockSpec(b3p.shape, lambda i: (0, 0)),
        ],
        out_specs=pl.BlockSpec((tb, out_size), lambda i: (i, 0)),
        compiler_params=pltpu.CompilerParams(
            dimension_semantics=("parallel",),               # megacore on v7x
        ),
    )(x, w1p, w2p, w3p, b1p, b2p, b3p)

    return out[:B] if bp != B else out


def init_actor_params(key, input_size, hidden_size, output_size):
    """Deterministic init mimicking nn.Linear default: U(-1/sqrt(fan_in), +)."""
    ks = jax.random.split(key, 6)

    def linear(kw, kb, fan_in, fan_out):
        bound = 1.0 / jnp.sqrt(jnp.float32(fan_in))
        w = jax.random.uniform(kw, (fan_in, fan_out), jnp.float32, -bound, bound)
        b = jax.random.uniform(kb, (1, fan_out), jnp.float32, -bound, bound)
        return w, b

    w1, b1 = linear(ks[0], ks[1], input_size, hidden_size)
    w2, b2 = linear(ks[2], ks[3], hidden_size, hidden_size)
    w3, b3 = linear(ks[4], ks[5], hidden_size, output_size)
    return {"w1": w1, "b1": b1, "w2": w2, "b2": b2, "w3": w3, "b3": b3}


def _reference_forward(state, p):
    h1 = jnp.maximum(state @ p["w1"] + p["b1"], 0.0)
    h2 = jnp.maximum(h1 @ p["w2"] + p["b2"], 0.0)
    return jnp.tanh(h2 @ p["w3"] + p["b3"])


if __name__ == "__main__":
    key = jax.random.PRNGKey(0)
    k_param, k_state = jax.random.split(key)

    batch = 8
    input_size = 16
    hidden_size = 32
    output_size = 8

    params = init_actor_params(k_param, input_size, hidden_size, output_size)
    packed = pack_actor_params(params)          # pack once, reuse every step
    state = jax.random.normal(k_state, (batch, input_size), jnp.float32)

    out = jax.block_until_ready(actor_forward(state, packed))
    ref = _reference_forward(state, params)
    assert out.shape == (batch, output_size)
    assert jnp.allclose(out, ref, atol=1e-5, rtol=1e-5)

    # Multi-tile batch that is not a multiple of the tile: exercises the
    # adaptive tb / tail-padding path and the 2-step grid (megacore) path.
    big_state = jax.random.normal(jax.random.PRNGKey(1), (1030, input_size), jnp.float32)
    big_out = jax.block_until_ready(actor_forward(big_state, packed))
    big_ref = _reference_forward(big_state, params)
    assert big_out.shape == (1030, output_size)
    assert jnp.allclose(big_out, big_ref, atol=1e-5, rtol=1e-5)

    print("KERNEL_OK")
</pallas_src>

<mosaic_0001>
module attributes {stable_mosaic.version = 11 : i64} {
  func.func @_actor_kernel(%arg0: i32, %arg1: memref<8x16xf32, #tpu.memory_space<vmem>>, %arg2: memref<16x128xf32, #tpu.memory_space<vmem>>, %arg3: memref<128x128xf32, #tpu.memory_space<vmem>>, %arg4: memref<128x8xf32, #tpu.memory_space<vmem>>, %arg5: memref<1x128xf32, #tpu.memory_space<vmem>>, %arg6: memref<1x128xf32, #tpu.memory_space<vmem>>, %arg7: memref<1x8xf32, #tpu.memory_space<vmem>>, %arg8: memref<8x8xf32, #tpu.memory_space<vmem>>) attributes {dimension_semantics = [#tpu.dimension_semantics<parallel>], iteration_bounds = array<i64: 1>, scalar_prefetch = 0 : i64, scratch_operands = 0 : i64, tpu.core_type = #tpu.core_type<tc>, window_params = [{transform_indices = @transform_0, window_bounds = array<i64: 8, 16>}, {pipeline_mode = #tpu.pipeline_mode<synchronous>, transform_indices = @transform_1, window_bounds = array<i64: 16, 128>}, {pipeline_mode = #tpu.pipeline_mode<synchronous>, transform_indices = @transform_2, window_bounds = array<i64: 128, 128>}, {pipeline_mode = #tpu.pipeline_mode<synchronous>, transform_indices = @transform_3, window_bounds = array<i64: 128, 8>}, {pipeline_mode = #tpu.pipeline_mode<synchronous>, transform_indices = @transform_4, window_bounds = array<i64: 1, 128>}, {pipeline_mode = #tpu.pipeline_mode<synchronous>, transform_indices = @transform_5, window_bounds = array<i64: 1, 128>}, {pipeline_mode = #tpu.pipeline_mode<synchronous>, transform_indices = @transform_6, window_bounds = array<i64: 1, 8>}, {transform_indices = @transform_7, window_bounds = array<i64: 8, 8>}]} {
    %c0 = arith.constant 0 : index
    %c0_0 = arith.constant 0 : index
    %0 = vector.load %arg1[%c0, %c0_0] : memref<8x16xf32, #tpu.memory_space<vmem>>, vector<8x16xf32>
    %c0_1 = arith.constant 0 : index
    %c0_2 = arith.constant 0 : index
    %1 = vector.load %arg2[%c0_1, %c0_2] : memref<16x128xf32, #tpu.memory_space<vmem>>, vector<16x128xf32>
    %cst = arith.constant dense<0.000000e+00> : vector<8x128xf32>
    %2 = tpu.matmul %0, %1, %cst {dimension_numbers = #tpu.dot_dimension_numbers<[1], [0], [0], [1], [0, 0, 1, 1], [], []>} : vector<8x16xf32>, vector<16x128xf32>, vector<8x128xf32> -> vector<8x128xf32>
    %c0_3 = arith.constant 0 : index
    %c0_4 = arith.constant 0 : index
    %3 = vector.load %arg5[%c0_3, %c0_4] : memref<1x128xf32, #tpu.memory_space<vmem>>, vector<1x128xf32>
    %4 = vector.broadcast %3 : vector<1x128xf32> to vector<8x128xf32>
    %5 = arith.addf %2, %4 : vector<8x128xf32>
    %cst_5 = arith.constant 0.000000e+00 : f32
    %6 = vector.broadcast %cst_5 : f32 to vector<8x128xf32>
    %7 = arith.maximumf %5, %6 : vector<8x128xf32>
    %c0_6 = arith.constant 0 : index
    %c0_7 = arith.constant 0 : index
    %8 = vector.load %arg3[%c0_6, %c0_7] : memref<128x128xf32, #tpu.memory_space<vmem>>, vector<128x128xf32>
    %cst_8 = arith.constant dense<0.000000e+00> : vector<8x128xf32>
    %9 = tpu.matmul %7, %8, %cst_8 {dimension_numbers = #tpu.dot_dimension_numbers<[1], [0], [0], [1], [0, 0, 1, 1], [], []>} : vector<8x128xf32>, vector<128x128xf32>, vector<8x128xf32> -> vector<8x128xf32>
    %c0_9 = arith.constant 0 : index
    %c0_10 = arith.constant 0 : index
    %10 = vector.load %arg6[%c0_9, %c0_10] : memref<1x128xf32, #tpu.memory_space<vmem>>, vector<1x128xf32>
    %11 = vector.broadcast %10 : vector<1x128xf32> to vector<8x128xf32>
    %12 = arith.addf %9, %11 : vector<8x128xf32>
    %cst_11 = arith.constant 0.000000e+00 : f32
    %13 = vector.broadcast %cst_11 : f32 to vector<8x128xf32>
    %14 = arith.maximumf %12, %13 : vector<8x128xf32>
    %c0_12 = arith.constant 0 : index
    %c0_13 = arith.constant 0 : index
    %15 = vector.load %arg4[%c0_12, %c0_13] : memref<128x8xf32, #tpu.memory_space<vmem>>, vector<128x8xf32>
    %cst_14 = arith.constant dense<0.000000e+00> : vector<8x8xf32>
    %16 = tpu.matmul %14, %15, %cst_14 {dimension_numbers = #tpu.dot_dimension_numbers<[1], [0], [0], [1], [0, 0, 1, 1], [], []>} : vector<8x128xf32>, vector<128x8xf32>, vector<8x8xf32> -> vector<8x8xf32>
    %c0_15 = arith.constant 0 : index
    %c0_16 = arith.constant 0 : index
    %17 = vector.load %arg7[%c0_15, %c0_16] : memref<1x8xf32, #tpu.memory_space<vmem>>, vector<1x8xf32>
    %18 = vector.broadcast %17 : vector<1x8xf32> to vector<8x8xf32>
    %19 = arith.addf %16, %18 : vector<8x8xf32>
    %20 = math.tanh %19 : vector<8x8xf32>
    %c0_17 = arith.constant 0 : index
    %c0_18 = arith.constant 0 : index
    %21 = vector.load %arg8[%c0_17, %c0_18] : memref<8x8xf32, #tpu.memory_space<vmem>>, vector<8x8xf32>
    tpu.vector_store %arg8[%c0_17, %c0_18], %20 {strides = array<i32>} : memref<8x8xf32, #tpu.memory_space<vmem>>, vector<8x8xf32>,
    return
  }
  func.func @transform_0(%arg0: i32) -> (i32, i32) {
    %c0_i32 = arith.constant 0 : i32
    %c0_i32_0 = arith.constant 0 : i32
    return %arg0, %c0_i32 : i32, i32
  }
  func.func @transform_1(%arg0: i32) -> (i32, i32) {
    %c0_i32 = arith.constant 0 : i32
    %c0_i32_0 = arith.constant 0 : i32
    %c0_i32_1 = arith.constant 0 : i32
    return %c0_i32, %c0_i32_0 : i32, i32
  }
  func.func @transform_2(%arg0: i32) -> (i32, i32) {
    %c0_i32 = arith.constant 0 : i32
    %c0_i32_0 = arith.constant 0 : i32
    %c0_i32_1 = arith.constant 0 : i32
    return %c0_i32, %c0_i32_0 : i32, i32
  }
  func.func @transform_3(%arg0: i32) -> (i32, i32) {
    %c0_i32 = arith.constant 0 : i32
    %c0_i32_0 = arith.constant 0 : i32
    %c0_i32_1 = arith.constant 0 : i32
    return %c0_i32, %c0_i32_0 : i32, i32
  }
  func.func @transform_4(%arg0: i32) -> (i32, i32) {
    %c0_i32 = arith.constant 0 : i32
    %c0_i32_0 = arith.constant 0 : i32
    %c0_i32_1 = arith.constant 0 : i32
    return %c0_i32, %c0_i32_0 : i32, i32
  }
  func.func @transform_5(%arg0: i32) -> (i32, i32) {
    %c0_i32 = arith.constant 0 : i32
    %c0_i32_0 = arith.constant 0 : i32
    %c0_i32_1 = arith.constant 0 : i32
    return %c0_i32, %c0_i32_0 : i32, i32
  }
  func.func @transform_6(%arg0: i32) -> (i32, i32) {
    %c0_i32 = arith.constant 0 : i32
    %c0_i32_0 = arith.constant 0 : i32
    %c0_i32_1 = arith.constant 0 : i32
    return %c0_i32, %c0_i32_0 : i32, i32
  }
  func.func @transform_7(%arg0: i32) -> (i32, i32) {
    %c0_i32 = arith.constant 0 : i32
    %c0_i32_0 = arith.constant 0 : i32
    return %arg0, %c0_i32 : i32, i32
  }
}

</mosaic_0001>

<llo_original>
// kernel: actor_forward.1
$region0: #{actor_forward.1}
  #allocation0 [shape = 'u32[]', space=smem, size = 0x4, offset = 0x4, fixed_abs, tag = 'smem constant byte address 0x4 - core index']
  #allocation1 [shape = 'u32[72,128]{1,0:T(1,128)}', space=vmem, size = 0x9000, scoped, tag = 'internal scratch']
  %s0 = inlined_call_operand.vmem [shape: f32[8,16], index: 0, kind: input, shape index: {}]
  %s1 = inlined_call_operand.hbm [shape: f32[16,128], index: 1, kind: input, shape index: {}]
  %s2 = inlined_call_operand.vmem [shape: f32[128,128], index: 2, kind: input, shape index: {}]
  %s3 = inlined_call_operand.vmem [shape: f32[128,8], index: 3, kind: input, shape index: {}]
  %s4 = inlined_call_operand.vmem [shape: f32[1,128], index: 4, kind: input, shape index: {}]
  %s5 = inlined_call_operand.vmem [shape: f32[1,128], index: 5, kind: input, shape index: {}]
  %s6 = inlined_call_operand.vmem [shape: f32[1,8], index: 6, kind: input, shape index: {}]
  %s7 = inlined_call_operand.hbm [shape: f32[8,8], index: 7, kind: output, shape index: {}]
  %s8 = sld [smem:[#allocation0]]
  $region42: #{actor_forward.1} parent=0
    _
  %s10 = ssub.s32 1, %s8
  %s11 = scalar_select 0, %s10, %s8
  $region1: #{actor_forward.1} parent=0
    #allocation2 [shape = 'u8[8192]{0}', space=vmem, size = 0x2000, scoped, tag = 'input window, operand 1, single buffered']
    #allocation3 [shape = 's32[1]{0}', space=sflag, size = 0x4, scoped, tag = 'scoped memory for actor_forward.1']
    #allocation4 [shape = 's32[1]{0}', space=sflag, size = 0x4, scoped, tag = 'scoped memory for actor_forward.1']
    #allocation5 [shape = 'u8[4096]{0}', space=vmem, size = 0x1000, scoped, tag = 'output window, operand 0, single buffered']
    %12 = vsyncpa [#allocation3], 0
    %13 = vsyncpa [#allocation4], 0
    // Predicated region
    $region2: #{actor_forward.1} parent=1 // pred_check
      _
    $region3: #{actor_forward.1} parent=1 // pred_check_branch
      %15 = sbr.rel (0) target = $region5
    $region4: #{actor_forward.1} parent=1 // pred_region
      _
    $region5: #{actor_forward.1} parent=1 // pred_fallthru
      _
    // Predicated region
    $region6: #{actor_forward.1} parent=1 // pred_check
      _
    $region7: #{actor_forward.1} parent=1 // pred_check_branch
      %17 = sbr.rel (0) target = $region9
    $region8: #{actor_forward.1} parent=1 // pred_region
      %19 = vsyncadd [#allocation3], 0
      %s20 = sshll.u32 %s1, 4
      %s21 = int_to_ptr.hbm [resolvable:$true] %s20
      %s22 = sshll.u32 [#allocation2], 4
      %s23 = int_to_ptr.vmem [resolvable:$true] %s22
      %28 = dma.hbm_to_vmem [thread:$0]  %s21, 256, %s23, [#allocation3], 128, 128, 8
    $region9: #{actor_forward.1} parent=1 // pred_fallthru
      _
    // Predicated region
    $region10: #{actor_forward.1} parent=1 // pred_check
      _
    $region11: #{actor_forward.1} parent=1 // pred_check_branch
      %30 = sbr.rel (0) target = $region13
    $region12: #{actor_forward.1} parent=1 // pred_region
      _
    $region13: #{actor_forward.1} parent=1 // pred_fallthru
      _
    // Predicated region
    $region14: #{actor_forward.1} parent=1 // pred_check
      _
    $region15: #{actor_forward.1} parent=1 // pred_check_branch
      %32 = sbr.rel (0) target = $region17
    $region16: #{actor_forward.1} parent=1 // pred_region
      _
    $region17: #{actor_forward.1} parent=1 // pred_fallthru
      _
    // Predicated region
    $region18: #{actor_forward.1} parent=1 // pred_check
      _
    $region19: #{actor_forward.1} parent=1 // pred_check_branch
      %34 = sbr.rel (0) target = $region21
    $region20: #{actor_forward.1} parent=1 // pred_region
      _
    $region21: #{actor_forward.1} parent=1 // pred_fallthru
      _
    // Predicated region
    $region22: #{actor_forward.1} parent=1 // pred_check
      _
    $region23: #{actor_forward.1} parent=1 // pred_check_branch
      %36 = sbr.rel (0) target = $region25
    $region24: #{actor_forward.1} parent=1 // pred_region
      _
    $region25: #{actor_forward.1} parent=1 // pred_fallthru
      _
    // Predicated region
    $region26: #{actor_forward.1} parent=1 // pred_check
      _
    $region27: #{actor_forward.1} parent=1 // pred_check_branch
      %38 = sbr.rel (0) target = $region29
    $region28: #{actor_forward.1} parent=1 // pred_region
      _
    $region29: #{actor_forward.1} parent=1 // pred_fallthru
      _
    // Predicated region
    $region30: #{actor_forward.1} parent=1 // pred_check
      _
    $region31: #{actor_forward.1} parent=1 // pred_check_branch
      %40 = sbr.rel (0) target = $region33
    $region32: #{actor_forward.1} parent=1 // pred_region
      %42 = dma.done [#allocation3], 256
    $region33: #{actor_forward.1} parent=1 // pred_fallthru
      _
    %v43 = vld [vmem:[%s0] sm:$0xff]
    %v44 = vld [vmem:[#allocation2] sm:$0xff]
    %v45 = vld [vmem:[#allocation2 + $0x8] sm:$0xff]
    %v46 = vld [vmem:[%s4] sm:$0x1]
    %v48 = vperm.slane %v46, 0
    %vm50 = vcmask 130048
    %v52 = vsel %vm50, %v43, 0
    %54 = vmatpush.msra.mxu0 0.0
    %55 = vmatpush.msra.mxu0 0.0
    %56 = vmatpush.msra.mxu0 0.0
    %57 = vmatpush.msra.mxu0 0.0
    %58 = vmatpush.msra.mxu0 0.0
    %59 = vmatpush.msra.mxu0 0.0
    %60 = vmatpush.msra.mxu0 0.0
    %61 = vmatpush.msra.mxu0 0.0
    %62 = vmatpush.msra.mxu0 0.0
    %63 = vmatpush.msra.mxu0 0.0
    %64 = vmatpush.msra.mxu0 0.0
    %65 = vmatpush.msra.mxu0 0.0
    %66 = vmatpush.msra.mxu0 0.0
    %67 = vmatpush.msra.mxu0 0.0
    %68 = vmatpush.msra.mxu0 %v45
    %69 = vmatpush.msra.mxu0 %v44
    %70 = vmatmul.f32.gmra.mxu0 %v52
    %v71 = vpop.f32.mrf.mxu0
    %v72 = vadd.f32 %v48, %v71
    %73 = vdwg.mxu0
    %v74 = vmax.f32 %v72, 0.0
    %v75 = vld [vmem:[%s2] sm:$0xff]
    %v76 = vld [vmem:[%s2 + $0x8] sm:$0xff]
    %v77 = vld [vmem:[%s2 + $0x10] sm:$0xff]
    %v78 = vld [vmem:[%s2 + $0x18] sm:$0xff]
    %v79 = vld [vmem:[%s2 + $0x20] sm:$0xff]
    %v80 = vld [vmem:[%s2 + $0x28] sm:$0xff]
    %v81 = vld [vmem:[%s2 + $0x30] sm:$0xff]
    %v82 = vld [vmem:[%s2 + $0x38] sm:$0xff]
    %v83 = vld [vmem:[%s2 + $0x40] sm:$0xff]
    %v84 = vld [vmem:[%s2 + $0x48] sm:$0xff]
    %v85 = vld [vmem:[%s2 + $0x50] sm:$0xff]
    %v86 = vld [vmem:[%s2 + $0x58] sm:$0xff]
    %v87 = vld [vmem:[%s2 + $0x60] sm:$0xff]
    %v88 = vld [vmem:[%s2 + $0x68] sm:$0xff]
    %v89 = vld [vmem:[%s2 + $0x70] sm:$0xff]
    %v90 = vld [vmem:[%s2 + $0x78] sm:$0xff]
    %v91 = vld [vmem:[%s5] sm:$0x1]
    %v93 = vperm.slane %v91, 0
    %95 = vmatpush.msra.mxu0 %v90
    %96 = vmatpush.msra.mxu0 %v89
    %97 = vmatpush.msra.mxu0 %v88
    %98 = vmatpush.msra.mxu0 %v87
    %99 = vmatpush.msra.mxu0 %v86
    %100 = vmatpush.msra.mxu0 %v85
    %101 = vmatpush.msra.mxu0 %v84
    %102 = vmatpush.msra.mxu0 %v83
    %103 = vmatpush.msra.mxu0 %v82
    %104 = vmatpush.msra.mxu0 %v81
    %105 = vmatpush.msra.mxu0 %v80
    %106 = vmatpush.msra.mxu0 %v79
    %107 = vmatpush.msra.mxu0 %v78
    %108 = vmatpush.msra.mxu0 %v77
    %109 = vmatpush.msra.mxu0 %v76
    %110 = vmatpush.msra.mxu0 %v75
    %111 = vmatmul.f32.gmra.mxu0 %v74
    %v112 = vpop.f32.mrf.mxu0
    %v113 = vadd.f32 %v93, %v112
    %114 = vdwg.mxu0
    %v115 = vmax.f32 %v113, 0.0
    %v116 = vld [vmem:[%s3] sm:$0xff]
    %v117 = vld [vmem:[%s3 + $0x8] sm:$0xff]
    %v118 = vld [vmem:[%s3 + $0x10] sm:$0xff]
    %v119 = vld [vmem:[%s3 + $0x18] sm:$0xff]
    %v120 = vld [vmem:[%s3 + $0x20] sm:$0xff]
    %v121 = vld [vmem:[%s3 + $0x28] sm:$0xff]
    %v122 = vld [vmem:[%s3 + $0x30] sm:$0xff]
    %v123 = vld [vmem:[%s3 + $0x38] sm:$0xff]
    %v124 = vld [vmem:[%s3 + $0x40] sm:$0xff]
    %v125 = vld [vmem:[%s3 + $0x48] sm:$0xff]
    %v126 = vld [vmem:[%s3 + $0x50] sm:$0xff]
    %v127 = vld [vmem:[%s3 + $0x58] sm:$0xff]
    %v128 = vld [vmem:[%s3 + $0x60] sm:$0xff]
    %v129 = vld [vmem:[%s3 + $0x68] sm:$0xff]
    %v130 = vld [vmem:[%s3 + $0x70] sm:$0xff]
    %v131 = vld [vmem:[%s3 + $0x78] sm:$0xff]
    %v132 = vld [vmem:[%s6] sm:$0x1]
    %v134 = vperm.slane %v132, 0
    %136 = vmatpush.msra.mxu0 %v131
    %137 = vmatpush.msra.mxu0 %v130
    %138 = vmatpush.msra.mxu0 %v129
    %139 = vmatpush.msra.mxu0 %v128
    %140 = vmatpush.msra.mxu0 %v127
    %141 = vmatpush.msra.mxu0 %v126
    %142 = vmatpush.msra.mxu0 %v125
    %143 = vmatpush.msra.mxu0 %v124
    %144 = vmatpush.msra.mxu0 %v123
    %145 = vmatpush.msra.mxu0 %v122
    %146 = vmatpush.msra.mxu0 %v121
    %147 = vmatpush.msra.mxu0 %v120
    %148 = vmatpush.msra.mxu0 %v119
    %149 = vmatpush.msra.mxu0 %v118
    %150 = vmatpush.msra.mxu0 %v117
    %151 = vmatpush.msra.mxu0 %v116
    %152 = vmatmul.f32.gmra.mxu0 %v115
    %v153 = vpop.f32.mrf.mxu0
    %v154 = vadd.f32 %v134, %v153
    %155 = vdwg.mxu0
    %v156 = vtanh.pop %v154
    %vm157 = vcmask 64512
    %158 = vst.msk [vmem:[#allocation5] sm:$0xff] %vm157, %v156
    // Predicated region
    $region34: #{actor_forward.1} parent=1 // pred_check
      _
    $region35: #{actor_forward.1} parent=1 // pred_check_branch
      %160 = sbr.rel (0) target = $region37
    $region36: #{actor_forward.1} parent=1 // pred_region
      %162 = vsyncadd [#allocation4], 0
      %s164 = sshll.u32 [#allocation5], 4
      %s165 = int_to_ptr.vmem [resolvable:$true] %s164
      %s166 = sshll.u32 %s7, 4
      %s167 = int_to_ptr.hbm [resolvable:$true] %s166
      %169 = dma.vmem_to_hbm [thread:$0]  %s165, 128, %s167, [#allocation4]
    $region37: #{actor_forward.1} parent=1 // pred_fallthru
      _
    // Predicated region
    $region38: #{actor_forward.1} parent=1 // pred_check
      _
    $region39: #{actor_forward.1} parent=1 // pred_check_branch
      %171 = sbr.rel (0) target = $region41
    $region40: #{actor_forward.1} parent=1 // pred_region
      %173 = dma.done [#allocation4], 128
    $region41: #{actor_forward.1} parent=1 // pred_fallthru
      _
    %174 = vsyncpa [#allocation3], 1
    %175 = vsyncpa [#allocation4], 1

</llo_original>
